<compile_context>
chip_gen: v7x
topology: tpu7x:2x2x1
jax: 0.10.0
libtpu: 0.0.40
codegen_flags: <defaults>
</compile_context>

<pallas_src>
import math

import jax
import jax.numpy as jnp
from jax.experimental import pallas as pl
from jax.experimental.pallas import tpu as pltpu

_SQRT_2_OVER_PI = math.sqrt(2.0 / math.pi)


def _gelu_tanh(x):
    # identical formula to the PyTorch reference gelu()
    return 0.5 * x * (1.0 + jnp.tanh(_SQRT_2_OVER_PI * (x + 0.044715 * x * x * x)))


def _ffn_kernel(x_ref, w1_ref, b1_ref, w2_ref, b2_ref, o_ref, acc_ref):
    k = pl.program_id(1)
    nk = pl.num_programs(1)

    @pl.when(k == 0)
    def _():
        # Seed the f32 accumulator with b2 so the bias is added exactly once and
        # no separate full-tile add is needed at finalize.
        acc_ref[...] = jnp.broadcast_to(
            b2_ref[...].astype(jnp.float32), acc_ref.shape
        )

    # First linear for this hidden tile: (tm, d_in_p) @ (d_in_p, tk) -> f32 acc.
    # x_ref / w1_ref are in the compute dtype (bf16 by default) for full MXU rate.
    h = jnp.dot(x_ref[...], w1_ref[...], preferred_element_type=jnp.float32)
    h = h + b1_ref[...].astype(jnp.float32)
    g = _gelu_tanh(h)  # GELU stays in f32 (EUP tanh + VPU poly)

    # Second linear: cast GELU output to the compute dtype (== w2_ref.dtype, bf16
    # by default -- set by the wrapper), accumulate in f32.
    partial = jnp.dot(
        g.astype(w2_ref.dtype), w2_ref[...], preferred_element_type=jnp.float32
    )

    @pl.when(k < nk - 1)
    def _():
        acc_ref[...] += partial

    @pl.when(k == nk - 1)
    def _():
        # Single lane-dense store at finalize; last partial folded in directly.
        o_ref[...] = (acc_ref[...] + partial).astype(o_ref.dtype)


# --------------------------------------------------------------------------- #
# Host-side planning / wrapping
# --------------------------------------------------------------------------- #
def _round_up(x, m):
    return ((x + m - 1) // m) * m


def _lane_pad(d):
    # 128-lane alignment; 256-alignment for dims > 128 (256x256 MXUs on v6e/v7x).
    return _round_up(d, 128) if d <= 128 else _round_up(d, 256)


def _vmem_capacity_bytes():
    try:
        return int(pltpu.get_tpu_info().vmem_capacity_bytes)
    except Exception:
        return 64 * 1024 * 1024  # conservative fallback (v7x has 64 MiB / TC)


def _maybe_pad2(a, rows, cols):
    pr, pc = rows - a.shape[0], cols - a.shape[1]
    if pr == 0 and pc == 0:
        return a  # skip jnp.pad entirely when no padding is needed
    return jnp.pad(a, ((0, pr), (0, pc)))


def _plan(d_in, d_hid, compute_dtype, tm, tk_hid):
    """Pick padded feature dims, hidden tile tk, row-tile target and vmem limit."""
    d_in_p = _lane_pad(d_in)
    d_hid_base = _lane_pad(d_hid)

    c = jnp.dtype(compute_dtype).itemsize
    vmem_cap = _vmem_capacity_bytes()
    budget = int(0.85 * vmem_cap)  # never request more than physical VMEM

    # Weights VMEM-resident when they comfortably fit: hidden grid axis collapses
    # to one step, W1/W2 block indices are constant and get DMA'd exactly once.
    w_bytes = 2 * d_in_p * d_hid_base * c
    if w_bytes <= vmem_cap // 3:
        tk = d_hid_base
    else:
        tk = min(max(256, _round_up(tk_hid, 256)), d_hid_base)
    d_hid_p = _round_up(d_hid_base, tk)

    def est(tm_e, tk_e):
        return (
            2 * tm_e * d_in_p * c        # x tile (double buffered)
            + 2 * d_in_p * tk_e * c      # W1 tile
            + 2 * tk_e * d_in_p * c      # W2 tile
            + 2 * tm_e * d_in_p * 4      # output tile (f32 worst case)
            + tm_e * d_in_p * 4          # f32 accumulator scratch
            + tm_e * tk_e * 4            # f32 h / gelu intermediate
            + 4 * (tk_e + d_in_p) * 4    # f32 biases
        )

    tm_plan = _round_up(max(8, tm), 8)
    while est(tm_plan, tk) > budget and tm_plan > 64:
        tm_plan = max(64, _round_up(tm_plan // 2, 8))
    while est(tm_plan, tk) > budget and tk > 256:
        tk = max(256, _round_up(tk // 2, 128))
        d_hid_p = _round_up(d_hid_base, tk)

    vmem_limit = int(min(budget, max(32 * 1024 * 1024, 2 * est(tm_plan, tk))))
    return d_in_p, d_hid_p, tk, tm_plan, vmem_limit


def make_positionwise_feed_forward(
    w1, b1, w2, b2, *, compute_dtype=jnp.bfloat16, tm=512, tk_hid=512,
    weight_buffers=2,
):
    """Build a fused FFN  y = gelu(x @ w1 + b1) @ w2 + b2  (tanh GELU).

    Weights are padded / cast to `compute_dtype` exactly once here (not per call).
    w1: [d_in, d_hid]  b1: [d_hid]  w2: [d_hid, d_in]  b2: [d_in]
    """
    d_in, d_hid = w1.shape
    assert w2.shape == (d_hid, d_in)

    d_in_p, d_hid_p, tk, tm_plan, vmem_limit = _plan(
        d_in, d_hid, compute_dtype, tm, tk_hid
    )

    # Pre-pad + pre-cast parameters (out of the per-call hot path). Biases stay f32.
    w1_p = _maybe_pad2(jnp.asarray(w1, compute_dtype), d_in_p, d_hid_p)
    w2_p = _maybe_pad2(jnp.asarray(w2, compute_dtype), d_hid_p, d_in_p)
    b1_p = _maybe_pad2(jnp.asarray(b1, jnp.float32).reshape(1, d_hid), 1, d_hid_p)
    b2_p = _maybe_pad2(jnp.asarray(b2, jnp.float32).reshape(1, d_in), 1, d_in_p)

    c_item = jnp.dtype(compute_dtype).itemsize

    def apply(x):
        *lead, d_in_x = x.shape
        assert d_in_x == d_in, (d_in_x, d_in)
        M = 1
        for s in lead:
            M *= s

        # Large row tile for MXU utilization / weight-DMA amortization, but never
        # larger than the 8-aligned problem; split so the "parallel" row axis has
        # at least 2 tiles (both v7x TensorCores stay busy).
        tm_eff = min(tm_plan, _round_up(M, 8))
        M_p = _round_up(M, tm_eff)
        if M_p // tm_eff < 2 and M > 8:
            tm_eff = _round_up(-(-M // 2), 8)
            M_p = _round_up(M, tm_eff)

        n_row = M_p // tm_eff
        grid_k = d_hid_p // tk
        grid = (n_row, grid_k)

        x2 = x.reshape(M, d_in).astype(compute_dtype)
        x2 = _maybe_pad2(x2, M_p, d_in_p)

        o_item = jnp.dtype(x.dtype).itemsize
        weight_passes = 1 if grid_k == 1 else n_row  # constant block idx => 1 DMA
        cost = pl.CostEstimate(
            flops=4 * M_p * d_in_p * d_hid_p,          # two matmuls
            transcendentals=M_p * d_hid_p,             # tanh in GELU
            bytes_accessed=int(
                M_p * d_in_p * (c_item + o_item)
                + weight_passes * 2 * d_in_p * d_hid_p * c_item
                + (d_hid_p + d_in_p) * 4
            ),
        )

        def w_spec(shape, index_map):
            # Deeper weight prefetch only makes sense when weights are streamed
            # (grid_k > 1); useful on v5e if the weight DMA is still exposed.
            if weight_buffers > 2 and grid_k > 1:
                return pl.BlockSpec(
                    shape, index_map, pipeline_mode=pl.Buffered(weight_buffers)
                )
            return pl.BlockSpec(shape, index_map)

        out2 = pl.pallas_call(
            _ffn_kernel,
            out_shape=jax.ShapeDtypeStruct((M_p, d_in_p), x.dtype),
            grid_spec=pltpu.PrefetchScalarGridSpec(
                num_scalar_prefetch=0,
                grid=grid,
                in_specs=[
                    pl.BlockSpec((tm_eff, d_in_p), lambda i, k: (i, 0)),  # x rows
                    w_spec((d_in_p, tk), lambda i, k: (0, k)),            # W1 tile
                    pl.BlockSpec((1, tk), lambda i, k: (0, k)),           # b1 tile
                    w_spec((tk, d_in_p), lambda i, k: (k, 0)),            # W2 tile
                    pl.BlockSpec((1, d_in_p), lambda i, k: (0, 0)),       # b2
                ],
                out_specs=pl.BlockSpec((tm_eff, d_in_p), lambda i, k: (i, 0)),
                scratch_shapes=[pltpu.VMEM((tm_eff, d_in_p), jnp.float32)],
            ),
            compiler_params=pltpu.CompilerParams(
                dimension_semantics=("parallel", "arbitrary"),
                vmem_limit_bytes=vmem_limit,
            ),
            cost_estimate=cost,
        )(x2, w1_p, b1_p, w2_p, b2_p)

        return out2[:M, :d_in].reshape(*lead, d_in)

    return apply


def positionwise_feed_forward(x, w1, b1, w2, b2, **kwargs):
    """One-shot convenience wrapper (re-pads weights each call; prefer the builder)."""
    return make_positionwise_feed_forward(w1, b1, w2, b2, **kwargs)(x)


if __name__ == "__main__":
    # small shapes consistent with the module
    B, S, d_in, d_hid = 2, 8, 32, 64

    key = jax.random.PRNGKey(0)
    kx, k1, kb1, k2, kb2 = jax.random.split(key, 5)

    # deterministic parameter init (uniform, like nn.Linear's default scale)
    bound1 = 1.0 / math.sqrt(d_in)
    bound2 = 1.0 / math.sqrt(d_hid)
    x = jax.random.normal(kx, (B, S, d_in), dtype=jnp.float32)
    w1 = jax.random.uniform(k1, (d_in, d_hid), jnp.float32, -bound1, bound1)
    b1 = jax.random.uniform(kb1, (d_hid,), jnp.float32, -bound1, bound1)
    w2 = jax.random.uniform(k2, (d_hid, d_in), jnp.float32, -bound2, bound2)
    b2 = jax.random.uniform(kb2, (d_in,), jnp.float32, -bound2, bound2)

    # pure-JAX reference (same tanh-GELU formula)
    ref = jnp.dot(_gelu_tanh(jnp.dot(x, w1) + b1), w2) + b2

    # Default (production) path: bf16 matmuls, f32 GELU + accumulation, weights
    # pre-padded/cast once by the builder, weights VMEM-resident (grid_k == 1).
    ffn_bf16 = make_positionwise_feed_forward(w1, b1, w2, b2)
    out_bf16 = jax.block_until_ready(ffn_bf16(x))
    assert out_bf16.shape == (B, S, d_in)
    assert out_bf16.dtype == x.dtype
    err_bf16 = float(jnp.max(jnp.abs(out_bf16 - ref)))
    assert err_bf16 < 5e-2, err_bf16

    # Exactness check of the kernel structure itself: f32 compute, tight tolerance.
    out_f32 = jax.block_until_ready(
        positionwise_feed_forward(x, w1, b1, w2, b2, compute_dtype=jnp.float32)
    )
    err_f32 = float(jnp.max(jnp.abs(out_f32 - ref)))
    assert jnp.allclose(out_f32, ref, atol=1e-4, rtol=1e-4), err_f32

    print("KERNEL_OK")
</pallas_src>

<mosaic_0001>
module attributes {stable_mosaic.version = 11 : i64} {
  func.func @_ffn_kernel(%arg0: i32, %arg1: i32, %arg2: memref<8x128xbf16, #tpu.memory_space<vmem>>, %arg3: memref<128x128xbf16, #tpu.memory_space<vmem>>, %arg4: memref<1x128xf32, #tpu.memory_space<vmem>>, %arg5: memref<128x128xbf16, #tpu.memory_space<vmem>>, %arg6: memref<1x128xf32, #tpu.memory_space<vmem>>, %arg7: memref<8x128xf32, #tpu.memory_space<vmem>>, %arg8: memref<8x128xf32, #tpu.memory_space<vmem>>) attributes {dimension_semantics = [#tpu.dimension_semantics<parallel>, #tpu.dimension_semantics<arbitrary>], iteration_bounds = array<i64: 2, 1>, scalar_prefetch = 0 : i64, scratch_operands = 1 : i64, tpu.core_type = #tpu.core_type<tc>, window_params = [{transform_indices = @transform_0, window_bounds = array<i64: 8, 128>}, {transform_indices = @transform_1, window_bounds = array<i64: 128, 128>}, {transform_indices = @transform_2, window_bounds = array<i64: 1, 128>}, {transform_indices = @transform_3, window_bounds = array<i64: 128, 128>}, {pipeline_mode = #tpu.pipeline_mode<synchronous>, transform_indices = @transform_4, window_bounds = array<i64: 1, 128>}, {transform_indices = @transform_5, window_bounds = array<i64: 8, 128>}]} {
    %c0_i32 = arith.constant 0 : i32
    %0 = arith.cmpi eq, %arg1, %c0_i32 : i32
    %1 = arith.extui %0 : i1 to i32
    %c0_i32_0 = arith.constant 0 : i32
    %2 = arith.cmpi ne, %1, %c0_i32_0 : i32
    scf.if %2 {
      %c0_17 = arith.constant 0 : index
      %c0_18 = arith.constant 0 : index
      %31 = vector.load %arg6[%c0_17, %c0_18] : memref<1x128xf32, #tpu.memory_space<vmem>>, vector<1x128xf32>
      %32 = vector.shape_cast %31 : vector<1x128xf32> to vector<1x128xf32>
      %33 = vector.broadcast %32 : vector<1x128xf32> to vector<8x128xf32>
      %c0_19 = arith.constant 0 : index
      %c0_20 = arith.constant 0 : index
      %34 = vector.load %arg8[%c0_19, %c0_20] : memref<8x128xf32, #tpu.memory_space<vmem>>, vector<8x128xf32>
      tpu.vector_store %arg8[%c0_19, %c0_20], %33 {strides = array<i32>} : memref<8x128xf32, #tpu.memory_space<vmem>>, vector<8x128xf32>,
    } else {
    }
    %c0 = arith.constant 0 : index
    %c0_1 = arith.constant 0 : index
    %3 = vector.load %arg2[%c0, %c0_1] : memref<8x128xbf16, #tpu.memory_space<vmem>>, vector<8x128xbf16>
    %c0_2 = arith.constant 0 : index
    %c0_3 = arith.constant 0 : index
    %4 = vector.load %arg3[%c0_2, %c0_3] : memref<128x128xbf16, #tpu.memory_space<vmem>>, vector<128x128xbf16>
    %cst = arith.constant dense<0.000000e+00> : vector<8x128xf32>
    %5 = tpu.matmul %3, %4, %cst {dimension_numbers = #tpu.dot_dimension_numbers<[1], [0], [0], [1], [0, 0, 1, 1], [], []>} : vector<8x128xbf16>, vector<128x128xbf16>, vector<8x128xf32> -> vector<8x128xf32>
    %c0_4 = arith.constant 0 : index
    %c0_5 = arith.constant 0 : index
    %6 = vector.load %arg4[%c0_4, %c0_5] : memref<1x128xf32, #tpu.memory_space<vmem>>, vector<1x128xf32>
    %7 = vector.broadcast %6 : vector<1x128xf32> to vector<8x128xf32>
    %8 = arith.addf %5, %7 : vector<8x128xf32>
    %cst_6 = arith.constant 5.000000e-01 : f32
    %9 = vector.broadcast %cst_6 : f32 to vector<8x128xf32>
    %10 = arith.mulf %9, %8 : vector<8x128xf32>
    %cst_7 = arith.constant 4.471500e-02 : f32
    %11 = vector.broadcast %cst_7 : f32 to vector<8x128xf32>
    %12 = arith.mulf %11, %8 : vector<8x128xf32>
    %13 = arith.mulf %12, %8 : vector<8x128xf32>
    %14 = arith.mulf %13, %8 : vector<8x128xf32>
    %15 = arith.addf %8, %14 : vector<8x128xf32>
    %cst_8 = arith.constant 0.797884583 : f32
    %16 = vector.broadcast %cst_8 : f32 to vector<8x128xf32>
    %17 = arith.mulf %16, %15 : vector<8x128xf32>
    %18 = math.tanh %17 : vector<8x128xf32>
    %cst_9 = arith.constant 1.000000e+00 : f32
    %19 = vector.broadcast %cst_9 : f32 to vector<8x128xf32>
    %20 = arith.addf %19, %18 : vector<8x128xf32>
    %21 = arith.mulf %10, %20 : vector<8x128xf32>
    %22 = arith.truncf %21 : vector<8x128xf32> to vector<8x128xbf16>
    %c0_10 = arith.constant 0 : index
    %c0_11 = arith.constant 0 : index
    %23 = vector.load %arg5[%c0_10, %c0_11] : memref<128x128xbf16, #tpu.memory_space<vmem>>, vector<128x128xbf16>
    %cst_12 = arith.constant dense<0.000000e+00> : vector<8x128xf32>
    %24 = tpu.matmul %22, %23, %cst_12 {dimension_numbers = #tpu.dot_dimension_numbers<[1], [0], [0], [1], [0, 0, 1, 1], [], []>} : vector<8x128xbf16>, vector<128x128xbf16>, vector<8x128xf32> -> vector<8x128xf32>
    %c0_i32_13 = arith.constant 0 : i32
    %25 = arith.cmpi slt, %arg1, %c0_i32_13 : i32
    %26 = arith.extui %25 : i1 to i32
    %c0_i32_14 = arith.constant 0 : i32
    %27 = arith.cmpi ne, %26, %c0_i32_14 : i32
    scf.if %27 {
      %c0_17 = arith.constant 0 : index
      %c0_18 = arith.constant 0 : index
      %31 = vector.load %arg8[%c0_17, %c0_18] : memref<8x128xf32, #tpu.memory_space<vmem>>, vector<8x128xf32>
      %32 = arith.addf %31, %24 : vector<8x128xf32>
      %c0_19 = arith.constant 0 : index
      %c0_20 = arith.constant 0 : index
      %33 = vector.load %arg8[%c0_19, %c0_20] : memref<8x128xf32, #tpu.memory_space<vmem>>, vector<8x128xf32>
      tpu.vector_store %arg8[%c0_19, %c0_20], %32 {strides = array<i32>} : memref<8x128xf32, #tpu.memory_space<vmem>>, vector<8x128xf32>,
    } else {
    }
    %c0_i32_15 = arith.constant 0 : i32
    %28 = arith.cmpi eq, %arg1, %c0_i32_15 : i32
    %29 = arith.extui %28 : i1 to i32
    %c0_i32_16 = arith.constant 0 : i32
    %30 = arith.cmpi ne, %29, %c0_i32_16 : i32
    scf.if %30 {
      %c0_17 = arith.constant 0 : index
      %c0_18 = arith.constant 0 : index
      %31 = vector.load %arg8[%c0_17, %c0_18] : memref<8x128xf32, #tpu.memory_space<vmem>>, vector<8x128xf32>
      %32 = arith.addf %31, %24 : vector<8x128xf32>
      %c0_19 = arith.constant 0 : index
      %c0_20 = arith.constant 0 : index
      %33 = vector.load %arg7[%c0_19, %c0_20] : memref<8x128xf32, #tpu.memory_space<vmem>>, vector<8x128xf32>
      tpu.vector_store %arg7[%c0_19, %c0_20], %32 {strides = array<i32>} : memref<8x128xf32, #tpu.memory_space<vmem>>, vector<8x128xf32>,
    } else {
    }
    return
  }
  func.func @transform_0(%arg0: i32, %arg1: i32) -> (i32, i32) {
    %c0_i32 = arith.constant 0 : i32
    %c0_i32_0 = arith.constant 0 : i32
    return %arg0, %c0_i32 : i32, i32
  }
  func.func @transform_1(%arg0: i32, %arg1: i32) -> (i32, i32) {
    %c0_i32 = arith.constant 0 : i32
    %c0_i32_0 = arith.constant 0 : i32
    return %c0_i32, %arg1 : i32, i32
  }
  func.func @transform_2(%arg0: i32, %arg1: i32) -> (i32, i32) {
    %c0_i32 = arith.constant 0 : i32
    %c0_i32_0 = arith.constant 0 : i32
    return %c0_i32, %arg1 : i32, i32
  }
  func.func @transform_3(%arg0: i32, %arg1: i32) -> (i32, i32) {
    %c0_i32 = arith.constant 0 : i32
    %c0_i32_0 = arith.constant 0 : i32
    return %arg1, %c0_i32 : i32, i32
  }
  func.func @transform_4(%arg0: i32, %arg1: i32) -> (i32, i32) {
    %c0_i32 = arith.constant 0 : i32
    %c0_i32_0 = arith.constant 0 : i32
    %c0_i32_1 = arith.constant 0 : i32
    return %c0_i32, %c0_i32_0 : i32, i32
  }
  func.func @transform_5(%arg0: i32, %arg1: i32) -> (i32, i32) {
    %c0_i32 = arith.constant 0 : i32
    %c0_i32_0 = arith.constant 0 : i32
    return %arg0, %c0_i32 : i32, i32
  }
}

</mosaic_0001>

<llo_original>
// kernel: tpu_custom_call.1
$region0: #{tpu_custom_call.1}
  #allocation0 [shape = 'u32[]', space=smem, size = 0x4, offset = 0x4, fixed_abs, tag = 'smem constant byte address 0x4 - core index']
  #allocation1 [shape = 'u32[144,128]{1,0:T(1,128)}', space=vmem, size = 0x12000, scoped, tag = 'internal scratch']
  #allocation2 [shape = 'f32[8,128]{1,0:T(8,128)}', space=vmem, size = 0x1000, scoped, tag = 'scratch operand']
  %s0 = inlined_call_operand.hbm [shape: bf16[16,128], index: 0, kind: input, shape index: {}]
  %s1 = inlined_call_operand.hbm [shape: bf16[128,128], index: 1, kind: input, shape index: {}]
  %s2 = inlined_call_operand.vmem [shape: f32[1,128], index: 2, kind: input, shape index: {}]
  %s3 = inlined_call_operand.hbm [shape: bf16[128,128], index: 3, kind: input, shape index: {}]
  %s4 = inlined_call_operand.vmem [shape: f32[1,128], index: 4, kind: input, shape index: {}]
  %s5 = inlined_call_operand.hbm [shape: f32[16,128], index: 5, kind: output, shape index: {}]
  %s6 = sld [smem:[#allocation0]]
  $region77: #{tpu_custom_call.1} parent=0
    _
  %s8 = ssub.s32 1, %s6
  %s9 = scalar_select 0, %s8, %s6
  $region1: #{tpu_custom_call.1} parent=0
    #allocation3 [shape = 'u8[4096]{0}', space=vmem, size = 0x1000, scoped, tag = 'input window, operand 0']
    #allocation4 [shape = 's32[2]{0}', space=sflag, size = 0x8, scoped, tag = 'scoped memory for tpu_custom_call.1']
    #allocation5 [shape = 's32[2]{0}', space=sflag, size = 0x8, scoped, tag = 'scoped memory for tpu_custom_call.1']
    #allocation6 [shape = 'u8[32768]{0}', space=vmem, size = 0x8000, scoped, tag = 'input window, operand 1, single buffered']
    #allocation7 [shape = 's32[1]{0}', space=sflag, size = 0x4, scoped, tag = 'scoped memory for tpu_custom_call.1']
    #allocation8 [shape = 'u8[32768]{0}', space=vmem, size = 0x8000, scoped, tag = 'input window, operand 3, single buffered']
    #allocation9 [shape = 'u8[8192]{0}', space=vmem, size = 0x2000, scoped, tag = 'output window, operand 0']
    %10 = vsyncpa [#allocation4], 0
    %s11 = scalar_lea.sflag [#allocation4], 1
    %12 = vsyncpa %s11, 0
    %13 = vsyncpa [#allocation7], 0
    %14 = vsyncpa [#allocation5], 0
    %s15 = scalar_lea.sflag [#allocation5], 1
    %16 = vsyncpa %s15, 0
    loop: start=0, step=1, limit=4
    $region2: #{tpu_custom_call.1} parent=1 // loop_pre_header
      _
    $region3: #{tpu_custom_call.1} parent=1 // loop_header
      %s18 = sphi 0, %s22
      %p19 = scmp.ge.s32.totalorder %s18, 4
      %s25 = sphi 0, %s37
      %s26 = sphi 0, %s33
      %s27 = sphi 0, %s25
      %s28 = sphi 0, %s26
      %s29 = sphi 0, %s27
      %s30 = sphi 0, %s28
      %s40 = sphi 0, %s42
      %s43 = sphi 0, %s40
      %s44 = sphi 0, %s43
      %s60 = sphi 0, %s44
      %s66 = sphi 0, %s68
      %s69 = sphi 0, %s66
      %s70 = sphi 0, %s69
      %s86 = sphi 0, %s70
      %s92 = sphi 0, %s94
      %s95 = sphi 0, %s92
      %s96 = sphi 0, %s95
      %s112 = sphi 0, %s96
      %s118 = sphi 0, %s120
      %s121 = sphi 0, %s118
      %s122 = sphi 0, %s121
      %s138 = sphi 0, %s122
      %s142 = sphi 0, %s142
      %s144 = sphi 0, %s142
      %s145 = sphi 0, %s144
      %s159 = sphi 0, %s145
      %s165 = sphi 0, %s167
      %s168 = sphi 0, %s165
      %s169 = sphi 0, %s168
      %s185 = sphi 0, %s169
    $region4: #{tpu_custom_call.1} parent=1 // loop_header_branch
      %21 = sbr.rel (%p19) target = $region8
    $region5: #{tpu_custom_call.1} parent=1 // loop_body
      %s23 = ssub.s32 %s18, 1
      %s24 = ssub.s32 %s18, 2
      %s31 = sadd.s32 1, %s26
      %p32 = scmp.ge.s32.totalorder %s31, 1
      %s33 = scalar_select %p32, 0, %s31
      %s34 = sadd.s32 1, %s25
      %s35 = scalar_select %p32, %s34, %s25
      %p36 = scmp.ge.s32.totalorder %s35, 2
      %s37 = scalar_select %p36, 0, %s35
      %s38 = ssub.s32 %s25, %s37
      %p39 = scmp.eq.s32.totalorder %s38, 0
      %s41 = sadd.s32 %s40, 1
      %s42 = scalar_select %p39, %s40, %s41
      %p45 = pneg %p39
      %p46 = scmp.eq.s32.totalorder %s18, 1
      %p47 = por %p45, %p46
      %p48 = scmp.ne.s32.totalorder %s40, %s43
      %p49 = scmp.eq.s32.totalorder %s18, 0
      %p50 = por %p48, %p49
      %p51 = scmp.ne.s32.totalorder %s40, %s43
      %p52 = scmp.eq.s32.totalorder %s23, 1
      %p53 = por %p51, %p52
      %p54 = scmp.ne.s32.totalorder %s43, %s44
      %p55 = scmp.eq.s32.totalorder %s23, 0
      %p56 = por %p54, %p55
      %p57 = scmp.ne.s32.totalorder %s43, %s44
      %p58 = scmp.eq.s32.totalorder %s24, 1
      %p59 = por %p57, %p58
      %p61 = scmp.ne.s32.totalorder %s44, %s60
      %p62 = scmp.eq.s32.totalorder %s24, 0
      %p63 = por %p61, %p62
      %s64 = ssub.s32 %s26, %s33
      %p65 = scmp.eq.s32.totalorder %s64, 0
      %s67 = sadd.s32 %s66, 1
      %s68 = scalar_select %p65, %s66, %s67
      %p71 = pneg %p65
      %p72 = scmp.eq.s32.totalorder %s18, 1
      %p73 = por %p71, %p72
      %p74 = scmp.ne.s32.totalorder %s66, %s69
      %p75 = scmp.eq.s32.totalorder %s18, 0
      %p76 = por %p74, %p75
      %p77 = scmp.ne.s32.totalorder %s66, %s69
      %p78 = scmp.eq.s32.totalorder %s23, 1
      %p79 = por %p77, %p78
      %p80 = scmp.ne.s32.totalorder %s69, %s70
      %p81 = scmp.eq.s32.totalorder %s23, 0
      %p82 = por %p80, %p81
      %p83 = scmp.ne.s32.totalorder %s69, %s70
      %p84 = scmp.eq.s32.totalorder %s24, 1
      %p85 = por %p83, %p84
      %p87 = scmp.ne.s32.totalorder %s70, %s86
      %p88 = scmp.eq.s32.totalorder %s24, 0
      %p89 = por %p87, %p88
      %s90 = ssub.s32 %s26, %s33
      %p91 = scmp.eq.s32.totalorder %s90, 0
      %s93 = sadd.s32 %s92, 1
      %s94 = scalar_select %p91, %s92, %s93
      %p97 = pneg %p91
      %p98 = scmp.eq.s32.totalorder %s18, 1
      %p99 = por %p97, %p98
      %p100 = scmp.ne.s32.totalorder %s92, %s95
      %p101 = scmp.eq.s32.totalorder %s18, 0
      %p102 = por %p100, %p101
      %p103 = scmp.ne.s32.totalorder %s92, %s95
      %p104 = scmp.eq.s32.totalorder %s23, 1
      %p105 = por %p103, %p104
      %p106 = scmp.ne.s32.totalorder %s95, %s96
      %p107 = scmp.eq.s32.totalorder %s23, 0
      %p108 = por %p106, %p107
      %p109 = scmp.ne.s32.totalorder %s95, %s96
      %p110 = scmp.eq.s32.totalorder %s24, 1
      %p111 = por %p109, %p110
      %p113 = scmp.ne.s32.totalorder %s96, %s112
      %p114 = scmp.eq.s32.totalorder %s24, 0
      %p115 = por %p113, %p114
      %s116 = ssub.s32 %s26, %s33
      %p117 = scmp.eq.s32.totalorder %s116, 0
      %s119 = sadd.s32 %s118, 1
      %s120 = scalar_select %p117, %s118, %s119
      %p123 = pneg %p117
      %p124 = scmp.eq.s32.totalorder %s18, 1
      %p125 = por %p123, %p124
      %p126 = scmp.ne.s32.totalorder %s118, %s121
      %p127 = scmp.eq.s32.totalorder %s18, 0
      %p128 = por %p126, %p127
      %p129 = scmp.ne.s32.totalorder %s118, %s121
      %p130 = scmp.eq.s32.totalorder %s23, 1
      %p131 = por %p129, %p130
      %p132 = scmp.ne.s32.totalorder %s121, %s122
      %p133 = scmp.eq.s32.totalorder %s23, 0
      %p134 = por %p132, %p133
      %p135 = scmp.ne.s32.totalorder %s121, %s122
      %p136 = scmp.eq.s32.totalorder %s24, 1
      %p137 = por %p135, %p136
      %p139 = scmp.ne.s32.totalorder %s122, %s138
      %p140 = scmp.eq.s32.totalorder %s24, 0
      %p141 = por %p139, %p140
      %s143 = sadd.s32 %s142, 1
      %p146 = scmp.eq.s32.totalorder %s18, 1
      %p147 = scmp.ne.s32.totalorder %s142, %s144
      %p148 = scmp.eq.s32.totalorder %s18, 0
      %p149 = por %p147, %p148
      %p150 = scmp.ne.s32.totalorder %s142, %s144
      %p151 = scmp.eq.s32.totalorder %s23, 1
      %p152 = por %p150, %p151
      %p153 = scmp.ne.s32.totalorder %s144, %s145
      %p154 = scmp.eq.s32.totalorder %s23, 0
      %p155 = por %p153, %p154
      %p156 = scmp.ne.s32.totalorder %s144, %s145
      %p157 = scmp.eq.s32.totalorder %s24, 1
      %p158 = por %p156, %p157
      %p160 = scmp.ne.s32.totalorder %s145, %s159
      %p161 = scmp.eq.s32.totalorder %s24, 0
      %p162 = por %p160, %p161
      %s163 = ssub.s32 %s25, %s37
      %p164 = scmp.eq.s32.totalorder %s163, 0
      %s166 = sadd.s32 %s165, 1
      %s167 = scalar_select %p164, %s165, %s166
      %p170 = pneg %p164
      %p171 = scmp.eq.s32.totalorder %s18, 1
      %p172 = por %p170, %p171
      %p173 = scmp.ne.s32.totalorder %s165, %s168
      %p174 = scmp.eq.s32.totalorder %s18, 0
      %p175 = por %p173, %p174
      %p176 = scmp.ne.s32.totalorder %s165, %s168
      %p177 = scmp.eq.s32.totalorder %s23, 1
      %p178 = por %p176, %p177
      %p179 = scmp.ne.s32.totalorder %s168, %s169
      %p180 = scmp.eq.s32.totalorder %s23, 0
      %p181 = por %p179, %p180
      %p182 = scmp.ne.s32.totalorder %s168, %s169
      %p183 = scmp.eq.s32.totalorder %s24, 1
      %p184 = por %p182, %p183
      %p186 = scmp.ne.s32.totalorder %s169, %s185
      %p187 = scmp.eq.s32.totalorder %s24, 0
      %p188 = por %p186, %p187
      %p189 = scmp.le.s32.totalorder 1, %s18
      %p190 = scmp.lt.s32.totalorder %s18, 3
      %p191 = pnand %p189, %p190
      %p192 = pneg %p191
      // Predicated region
      $region9: #{tpu_custom_call.1} parent=5 // pred_check
        _
      $region10: #{tpu_custom_call.1} parent=5 // pred_check_branch
        %194 = sbr.rel (%p191) target = $region12
      $region11: #{tpu_custom_call.1} parent=5 // pred_region
        %s195 = ssub.s32 %s18, 1
        // Predicated region
        $region13: #{tpu_custom_call.1} parent=11 // pred_check
          %p196 = pneg %p82
        $region14: #{tpu_custom_call.1} parent=11 // pred_check_branch
          %198 = sbr.rel (%p196) target = $region16
        $region15: #{tpu_custom_call.1} parent=11 // pred_region
          %s200 = ssub.s32 1024, 1024
          %201 = vsyncadd [#allocation7], %s200
          %s202 = smul.addr %s28, 64
          %s203 = scalar_lea.hbm %s1, %s202
          %s204 = sshll.u32 [#allocation6], 4
          %s205 = int_to_ptr.vmem [resolvable:$true] %s204
          %210 = dma.hbm_to_vmem [thread:$0]  %s203, 1024, %s205, [#allocation7], 64, 64, 4
        $region16: #{tpu_custom_call.1} parent=11 // pred_fallthru
          _
        // Predicated region
        $region17: #{tpu_custom_call.1} parent=11 // pred_check
          %p211 = pneg %p108
        $region18: #{tpu_custom_call.1} parent=11 // pred_check_branch
          %213 = sbr.rel (%p211) target = $region20
        $region19: #{tpu_custom_call.1} parent=11 // pred_region
          %p214 = scmp.lt.s32.totalorder %s28, 0
          %s215 = scalar_select %p214, %s28, 0
          %s216 = scalar_lea.vmem %s2, %s215
        $region20: #{tpu_custom_call.1} parent=11 // pred_fallthru
          _
        // Predicated region
        $region21: #{tpu_custom_call.1} parent=11 // pred_check
          %p217 = pneg %p134
        $region22: #{tpu_custom_call.1} parent=11 // pred_check_branch
          %219 = sbr.rel (%p217) target = $region24
        $region23: #{tpu_custom_call.1} parent=11 // pred_region
          %s220 = smul.u32 16, %s28
          %s222 = ssub.s32 1024, 1024
          %223 = vsyncadd [#allocation7], %s222
          %s224 = smul.addr %s220, 64
          %s225 = scalar_lea.hbm %s3, %s224
          %s226 = sshll.u32 [#allocation8], 4
          %s227 = int_to_ptr.vmem [resolvable:$true] %s226
          %232 = dma.hbm_to_vmem [thread:$0]  %s225, 1024, %s227, [#allocation7], 64, 64, 4
        $region24: #{tpu_custom_call.1} parent=11 // pred_fallthru
          _
        // Predicated region
        $region25: #{tpu_custom_call.1} parent=11 // pred_check
          %p233 = pneg %p155
        $region26: #{tpu_custom_call.1} parent=11 // pred_check_branch
          %235 = sbr.rel (%p233) target = $region28
        $region27: #{tpu_custom_call.1} parent=11 // pred_region
          _
        $region28: #{tpu_custom_call.1} parent=11 // pred_fallthru
          _
      $region12: #{tpu_custom_call.1} parent=5 // pred_fallthru
        _
      %p236 = scmp.lt.s32.totalorder %s18, 2
      // Predicated region
      $region29: #{tpu_custom_call.1} parent=5 // pred_check
        %p237 = pneg %p236
      $region30: #{tpu_custom_call.1} parent=5 // pred_check_branch
        %239 = sbr.rel (%p237) target = $region32
      $region31: #{tpu_custom_call.1} parent=5 // pred_region
        // Predicated region
        $region33: #{tpu_custom_call.1} parent=31 // pred_check
          %p240 = pneg %p50
        $region34: #{tpu_custom_call.1} parent=31 // pred_check_branch
          %242 = sbr.rel (%p240) target = $region36
        $region35: #{tpu_custom_call.1} parent=31 // pred_region
          %s243 = sand.u32 %s40, 1
          %s244 = scalar_lea.sflag [#allocation4], %s243
          %s245 = sand.u32 %s40, 1
          %s246 = smul.addr %s245, 4
          %s247 = scalar_lea.vmem [#allocation3], %s246
          %s249 = ssub.s32 64, 64
          %250 = vsyncadd %s244, %s249
          %s251 = smul.addr %s25, 64
          %s252 = scalar_lea.hbm %s0, %s251
          %s254 = sshll.u32 %s247, 4
          %s255 = int_to_ptr.vmem [resolvable:$true] %s254
          %257 = dma.hbm_to_vmem [thread:$0]  %s252, 64, %s255, %s244
        $region36: #{tpu_custom_call.1} parent=31 // pred_fallthru
          _
      $region32: #{tpu_custom_call.1} parent=5 // pred_fallthru
        _
      %p258 = scmp.le.s32.totalorder 1, %s18
      %p259 = scmp.lt.s32.totalorder %s18, 3
      %p260 = pnand %p258, %p259
      %p261 = pneg %p260
      // Predicated region
      $region37: #{tpu_custom_call.1} parent=5 // pred_check
        _
      $region38: #{tpu_custom_call.1} parent=5 // pred_check_branch
        %263 = sbr.rel (%p260) target = $region40
      $region39: #{tpu_custom_call.1} parent=5 // pred_region
        %s264 = ssub.s32 %s18, 1
        %s265 = sand.u32 %s43, 1
        %s266 = scalar_lea.sflag [#allocation4], %s265
        %s267 = sand.u32 %s43, 1
        %s268 = smul.addr %s267, 4
        %s269 = scalar_lea.vmem [#allocation3], %s268
        // Predicated region
        $region41: #{tpu_custom_call.1} parent=39 // pred_check
          %p270 = pneg %p56
        $region42: #{tpu_custom_call.1} parent=39 // pred_check_branch
          %272 = sbr.rel (%p270) target = $region44
        $region43: #{tpu_custom_call.1} parent=39 // pred_region
          %273 = dma.done %s266, 64
        $region44: #{tpu_custom_call.1} parent=39 // pred_fallthru
          _
        // Predicated region
        $region45: #{tpu_custom_call.1} parent=39 // pred_check
          %p274 = pneg %p82
        $region46: #{tpu_custom_call.1} parent=39 // pred_check_branch
          %276 = sbr.rel (%p274) target = $region48
        $region47: #{tpu_custom_call.1} parent=39 // pred_region
          %277 = dma.done [#allocation7], 1024
        $region48: #{tpu_custom_call.1} parent=39 // pred_fallthru
          _
        // Predicated region
        $region49: #{tpu_custom_call.1} parent=39 // pred_check
          %p278 = pneg %p134
        $region50: #{tpu_custom_call.1} parent=39 // pred_check_branch
          %280 = sbr.rel (%p278) target = $region52
        $region51: #{tpu_custom_call.1} parent=39 // pred_region
          %281 = dma.done [#allocation7], 1024
        $region52: #{tpu_custom_call.1} parent=39 // pred_fallthru
          _
        %s282 = sand.u32 %s43, 1
        %s283 = scalar_lea.sflag [#allocation4], %s282
        %s284 = sand.u32 %s43, 1
        %s285 = smul.addr %s284, 4
        %s286 = scalar_lea.vmem [#allocation3], %s285
        %p287 = pneg %p56
        %p288 = pneg %p53
        %p289 = pneg %p82
        %p290 = pneg %p79
        %p291 = scmp.lt.s32.totalorder %s28, 0
        %s292 = scalar_select %p291, %s28, 0
        %s293 = scalar_lea.vmem %s2, %s292
        %p294 = pneg %p108
        %p295 = pneg %p105
        %p296 = pneg %p134
        %p297 = pneg %p131
        %p298 = pneg %p155
        %p299 = pneg %p152
        %p300 = pneg %p181
        %p301 = pneg %p178
        %s302 = sand.u32 %s168, 1
        %s303 = scalar_lea.sflag [#allocation5], %s302
        %s304 = sand.u32 %s168, 1
        %s305 = smul.addr %s304, 8
        %s306 = scalar_lea.vmem [#allocation9], %s305
        %p307 = scmp.lt.s32.totalorder %s28, 0
        %s308 = scalar_select %p307, %s28, 0
        %s309 = scalar_lea.vmem %s2, %s308
        %s310 = smul.u32 16, %s28
        %p312 = scmp.eq.s32.totalorder %s28, 0
        // Predicated region
        $region53: #{tpu_custom_call.1} parent=39 // pred_check
          %p313 = pneg %p312
        $region54: #{tpu_custom_call.1} parent=39 // pred_check_branch
          %315 = sbr.rel (%p313) target = $region56
        $region55: #{tpu_custom_call.1} parent=39 // pred_region
          %v316 = vld [vmem:[%s4] sm:$0x1]
          %v318 = vlaneseq
          %v319 = vshrl.u32 %v318, 7
          %v320 = vsub.s32 0, %v319
          %v321 = vrot.slane %v316, %v320
          %323 = vst [vmem:[#allocation2] sm:$0xff] %v321
        $region56: #{tpu_custom_call.1} parent=39 // pred_fallthru
          _
        %v324 = vld [vmem:[%s269] sm:$0xf]
        %v325 = vld [vmem:[#allocation6] sm:$0xf]
        %v326 = vld [vmem:[#allocation6 + $0x4] sm:$0xf]
        %v327 = vld [vmem:[#allocation6 + $0x8] sm:$0xf]
        %v328 = vld [vmem:[#allocation6 + $0xc] sm:$0xf]
        %v329 = vld [vmem:[#allocation6 + $0x10] sm:$0xf]
        %v330 = vld [vmem:[#allocation6 + $0x14] sm:$0xf]
        %v331 = vld [vmem:[#allocation6 + $0x18] sm:$0xf]
        %v332 = vld [vmem:[#allocation6 + $0x1c] sm:$0xf]
        %v333 = vld [vmem:[#allocation6 + $0x20] sm:$0xf]
        %v334 = vld [vmem:[#allocation6 + $0x24] sm:$0xf]
        %v335 = vld [vmem:[#allocation6 + $0x28] sm:$0xf]
        %v336 = vld [vmem:[#allocation6 + $0x2c] sm:$0xf]
        %v337 = vld [vmem:[#allocation6 + $0x30] sm:$0xf]
        %v338 = vld [vmem:[#allocation6 + $0x34] sm:$0xf]
        %v339 = vld [vmem:[#allocation6 + $0x38] sm:$0xf]
        %v340 = vld [vmem:[#allocation6 + $0x3c] sm:$0xf]
        %v341 = vld [vmem:[%s309] sm:$0x1]
        %v343 = vlaneseq
        %v344 = vshrl.u32 %v343, 7
        %v345 = vsub.s32 0, %v344
        %v346 = vrot.slane %v341, %v345
        %v364 = vunpack.c.l.b16 %v325
        %v365 = vunpack.c.l.b16 %v326
        %v366 = vunpack.c.l.b16 %v327
        %v367 = vunpack.c.l.b16 %v328
        %v368 = vunpack.c.l.b16 %v329
        %v369 = vunpack.c.l.b16 %v330
        %v370 = vunpack.c.l.b16 %v331
        %v371 = vunpack.c.l.b16 %v332
        %v372 = vunpack.c.l.b16 %v333
        %v373 = vunpack.c.l.b16 %v334
        %v374 = vunpack.c.l.b16 %v335
        %v375 = vunpack.c.l.b16 %v336
        %v376 = vunpack.c.l.b16 %v337
        %v377 = vunpack.c.l.b16 %v338
        %v378 = vunpack.c.l.b16 %v339
        %v379 = vunpack.c.l.b16 %v340
        %v380 = vpack.c.b16 %v365, %v364
        %v381 = vpack.c.b16 %v367, %v366
        %v382 = vpack.c.b16 %v369, %v368
        %v383 = vpack.c.b16 %v371, %v370
        %v384 = vpack.c.b16 %v373, %v372
        %v385 = vpack.c.b16 %v375, %v374
        %v386 = vpack.c.b16 %v377, %v376
        %v387 = vpack.c.b16 %v379, %v378
        %396 = vmatprep.subr.bf16.mxu0 0
        %397 = vmatpush1.bf16.msra.mxu0 %v380
        %398 = vmatprep.subr.bf16.mxu0 0
        %399 = vmatpush1.bf16.msra.mxu0 %v381
        %400 = vmatprep.subr.bf16.mxu0 0
        %401 = vmatpush1.bf16.msra.mxu0 %v382
        %402 = vmatprep.subr.bf16.mxu0 0
        %403 = vmatpush1.bf16.msra.mxu0 %v383
        %404 = vmatprep.subr.bf16.mxu0 0
        %405 = vmatpush1.bf16.msra.mxu0 %v384
        %406 = vmatprep.subr.bf16.mxu0 0
        %407 = vmatpush1.bf16.msra.mxu0 %v385
        %408 = vmatprep.subr.bf16.mxu0 0
        %409 = vmatpush1.bf16.msra.mxu0 %v386
        %410 = vmatprep.subr.bf16.mxu0 0
        %411 = vmatpush1.bf16.msra.mxu0 %v387
        %412 = vmatprep.subr.bf16.mxu0 0
        %413 = vmatpush1.bf16.msra.mxu0 0
        %414 = vmatprep.subr.bf16.mxu0 0
        %415 = vmatpush1.bf16.msra.mxu0 0
        %416 = vmatprep.subr.bf16.mxu0 0
        %417 = vmatpush1.bf16.msra.mxu0 0
        %418 = vmatprep.subr.bf16.mxu0 0
        %419 = vmatpush1.bf16.msra.mxu0 0
        %420 = vmatprep.subr.bf16.mxu0 0
        %421 = vmatpush1.bf16.msra.mxu0 0
        %422 = vmatprep.subr.bf16.mxu0 0
        %423 = vmatpush1.bf16.msra.mxu0 0
        %424 = vmatprep.subr.bf16.mxu0 0
        %425 = vmatpush1.bf16.msra.mxu0 0
        %426 = vmatprep.subr.bf16.mxu0 0
        %427 = vmatpush1.bf16.msra.mxu0 0
        %428 = vmatprep.mubr.bf16.mxu0 0
        %429 = vmatmul.mubr.bf16.gmra.mrb[0].mxu0 %v324
        %v430 = vpop.f32.mrb[0].mxu0
        %v431 = vadd.f32 %v346, %v430
        %v432 = vpop.f32.mrb[0].mxu0
        %v433 = vpop.f32.mrb[0].mxu0
        %v434 = vpop.f32.mrb[0].mxu0
        %435 = vdwg.mxu0
        %v436 = vmul.f32 %v431, 0.5
        %v437 = vmul.f32 %v431, 0.044715
        %v438 = vmul.f32 %v437, %v431
        %v439 = vmul.f32 %v438, %v431
        %v440 = vadd.f32 %v431, %v439
        %v441 = vmul.f32 %v440, 0.7978846
        %v442 = vtanh.pop %v441
        %v443 = vadd.f32 %v442, 1.0
        %v444 = vmul.f32 %v436, %v443
        %v445 = vpack.c.bf16 %v444, %v444
        %v446 = vld [vmem:[#allocation8] sm:$0xf]
        %v447 = vld [vmem:[#allocation8 + $0x4] sm:$0xf]
        %v448 = vld [vmem:[#allocation8 + $0x8] sm:$0xf]
        %v449 = vld [vmem:[#allocation8 + $0xc] sm:$0xf]
        %v450 = vld [vmem:[#allocation8 + $0x10] sm:$0xf]
        %v451 = vld [vmem:[#allocation8 + $0x14] sm:$0xf]
        %v452 = vld [vmem:[#allocation8 + $0x18] sm:$0xf]
        %v453 = vld [vmem:[#allocation8 + $0x1c] sm:$0xf]
        %v454 = vld [vmem:[#allocation8 + $0x20] sm:$0xf]
        %v455 = vld [vmem:[#allocation8 + $0x24] sm:$0xf]
        %v456 = vld [vmem:[#allocation8 + $0x28] sm:$0xf]
        %v457 = vld [vmem:[#allocation8 + $0x2c] sm:$0xf]
        %v458 = vld [vmem:[#allocation8 + $0x30] sm:$0xf]
        %v459 = vld [vmem:[#allocation8 + $0x34] sm:$0xf]
        %v460 = vld [vmem:[#allocation8 + $0x38] sm:$0xf]
        %v461 = vld [vmem:[#allocation8 + $0x3c] sm:$0xf]
        %v478 = vunpack.c.l.b16 %v446
        %v479 = vunpack.c.l.b16 %v447
        %v480 = vunpack.c.l.b16 %v448
        %v481 = vunpack.c.l.b16 %v449
        %v482 = vunpack.c.l.b16 %v450
        %v483 = vunpack.c.l.b16 %v451
        %v484 = vunpack.c.l.b16 %v452
        %v485 = vunpack.c.l.b16 %v453
        %v486 = vunpack.c.l.b16 %v454
        %v487 = vunpack.c.l.b16 %v455
        %v488 = vunpack.c.l.b16 %v456
        %v489 = vunpack.c.l.b16 %v457
        %v490 = vunpack.c.l.b16 %v458
        %v491 = vunpack.c.l.b16 %v459
        %v492 = vunpack.c.l.b16 %v460
        %v493 = vunpack.c.l.b16 %v461
        %v494 = vpack.c.b16 %v479, %v478
        %v495 = vpack.c.b16 %v481, %v480
        %v496 = vpack.c.b16 %v483, %v482
        %v497 = vpack.c.b16 %v485, %v484
        %v498 = vpack.c.b16 %v487, %v486
        %v499 = vpack.c.b16 %v489, %v488
        %v500 = vpack.c.b16 %v491, %v490
        %v501 = vpack.c.b16 %v493, %v492
        %510 = vmatprep.subr.bf16.mxu0 0
        %511 = vmatpush1.bf16.msra.mxu0 %v494
        %512 = vmatprep.subr.bf16.mxu0 0
        %513 = vmatpush1.bf16.msra.mxu0 %v495
        %514 = vmatprep.subr.bf16.mxu0 0
        %515 = vmatpush1.bf16.msra.mxu0 %v496
        %516 = vmatprep.subr.bf16.mxu0 0
        %517 = vmatpush1.bf16.msra.mxu0 %v497
        %518 = vmatprep.subr.bf16.mxu0 0
        %519 = vmatpush1.bf16.msra.mxu0 %v498
        %520 = vmatprep.subr.bf16.mxu0 0
        %521 = vmatpush1.bf16.msra.mxu0 %v499
        %522 = vmatprep.subr.bf16.mxu0 0
        %523 = vmatpush1.bf16.msra.mxu0 %v500
        %524 = vmatprep.subr.bf16.mxu0 0
        %525 = vmatpush1.bf16.msra.mxu0 %v501
        %526 = vmatprep.subr.bf16.mxu0 0
        %527 = vmatpush1.bf16.msra.mxu0 0
        %528 = vmatprep.subr.bf16.mxu0 0
        %529 = vmatpush1.bf16.msra.mxu0 0
        %530 = vmatprep.subr.bf16.mxu0 0
        %531 = vmatpush1.bf16.msra.mxu0 0
        %532 = vmatprep.subr.bf16.mxu0 0
        %533 = vmatpush1.bf16.msra.mxu0 0
        %534 = vmatprep.subr.bf16.mxu0 0
        %535 = vmatpush1.bf16.msra.mxu0 0
        %536 = vmatprep.subr.bf16.mxu0 0
        %537 = vmatpush1.bf16.msra.mxu0 0
        %538 = vmatprep.subr.bf16.mxu0 0
        %539 = vmatpush1.bf16.msra.mxu0 0
        %540 = vmatprep.subr.bf16.mxu0 0
        %541 = vmatpush1.bf16.msra.mxu0 0
        %542 = vmatprep.mubr.bf16.mxu0 0
        %543 = vmatmul.mubr.bf16.gmra.mrb[0].mxu0 %v445
        %v544 = vpop.f32.mrb[0].mxu0
        %v545 = vadd.f32 0.0, %v544
        %v546 = vpop.f32.mrb[0].mxu0
        %v547 = vpop.f32.mrb[0].mxu0
        %v548 = vpop.f32.mrb[0].mxu0
        %549 = vdwg.mxu0
        %p550 = scmp.lt.s32.totalorder %s28, 0
        // Predicated region
        $region57: #{tpu_custom_call.1} parent=39 // pred_check
          %p551 = pneg %p550
        $region58: #{tpu_custom_call.1} parent=39 // pred_check_branch
          %553 = sbr.rel (%p551) target = $region60
        $region59: #{tpu_custom_call.1} parent=39 // pred_region
          %v554 = vld [vmem:[#allocation2] sm:$0xff]
          %v555 = vadd.f32 %v554, %v545
          %556 = vst [vmem:[#allocation2] sm:$0xff] %v555
        $region60: #{tpu_custom_call.1} parent=39 // pred_fallthru
          _
        // Predicated region
        $region61: #{tpu_custom_call.1} parent=39 // pred_check
          %p557 = pneg %p312
        $region62: #{tpu_custom_call.1} parent=39 // pred_check_branch
          %559 = sbr.rel (%p557) target = $region64
        $region63: #{tpu_custom_call.1} parent=39 // pred_region
          %v560 = vld [vmem:[#allocation2] sm:$0xff]
          %v561 = vadd.f32 %v560, %v545
          %562 = vst [vmem:[%s306] sm:$0xff] %v561
        $region64: #{tpu_custom_call.1} parent=39 // pred_fallthru
          _
        %s563 = sand.u32 %s168, 1
        %s564 = scalar_lea.sflag [#allocation5], %s563
        %s565 = sand.u32 %s168, 1
        %s566 = smul.addr %s565, 8
        %s567 = scalar_lea.vmem [#allocation9], %s566
        // Predicated region
        $region65: #{tpu_custom_call.1} parent=39 // pred_check
          %p568 = pneg %p178
        $region66: #{tpu_custom_call.1} parent=39 // pred_check_branch
          %570 = sbr.rel (%p568) target = $region68
        $region67: #{tpu_custom_call.1} parent=39 // pred_region
          %s572 = ssub.s32 128, 128
          %573 = vsyncadd %s564, %s572
          %s574 = smul.addr %s27, 128
          %s575 = scalar_lea.hbm %s5, %s574
          %s577 = sshll.u32 %s567, 4
          %s578 = int_to_ptr.vmem [resolvable:$true] %s577
          %580 = dma.vmem_to_hbm [thread:$0]  %s578, 128, %s575, %s564
        $region68: #{tpu_custom_call.1} parent=39 // pred_fallthru
          _
      $region40: #{tpu_custom_call.1} parent=5 // pred_fallthru
        _
      %p581 = scmp.le.s32.totalorder 2, %s18
      // Predicated region
      $region69: #{tpu_custom_call.1} parent=5 // pred_check
        %p582 = pneg %p581
      $region70: #{tpu_custom_call.1} parent=5 // pred_check_branch
        %584 = sbr.rel (%p582) target = $region72
      $region71: #{tpu_custom_call.1} parent=5 // pred_region
        %s585 = ssub.s32 %s18, 2
        // Predicated region
        $region73: #{tpu_custom_call.1} parent=71 // pred_check
          %p586 = pneg %p184
        $region74: #{tpu_custom_call.1} parent=71 // pred_check_branch
          %588 = sbr.rel (%p586) target = $region76
        $region75: #{tpu_custom_call.1} parent=71 // pred_region
          %s589 = sand.u32 %s169, 1
          %s590 = scalar_lea.sflag [#allocation5], %s589
          %s591 = sand.u32 %s169, 1
          %s592 = smul.addr %s591, 8
          %s593 = scalar_lea.vmem [#allocation9], %s592
          %594 = dma.done %s590, 128
        $region76: #{tpu_custom_call.1} parent=71 // pred_fallthru
          _
      $region72: #{tpu_custom_call.1} parent=5 // pred_fallthru
        _
    $region6: #{tpu_custom_call.1} parent=1 // loop_footer
      %s22 = sadd.s32 1, %s18
    $region7: #{tpu_custom_call.1} parent=1 // loop_footer_branch
      %17 = sbr.rel target = $region3
    $region8: #{tpu_custom_call.1} parent=1 // loop_exit
      _
    %595 = vsyncpa [#allocation4], 1
    %s596 = scalar_lea.sflag [#allocation4], 1
    %597 = vsyncpa %s596, 1
    %598 = vsyncpa [#allocation7], 1
    %599 = vsyncpa [#allocation5], 1
    %s600 = scalar_lea.sflag [#allocation5], 1
    %601 = vsyncpa %s600, 1

</llo_original>
